<compile_context>
chip_gen: v5e
topology: v5e:2x2
jax: 0.10.0
libtpu: 0.0.40
codegen_flags: <defaults>
</compile_context>

<pallas_src>
import functools

import jax
import jax.numpy as jnp
from jax import lax
from jax.experimental import pallas as pl
from jax.experimental.pallas import tpu as pltpu


# ----------------------------------------------------------------------------
# Fused kernel: conv-as-matmul + GroupNorm + Tanh + HardSwish(simplified) +
# residual + LogSumExp over channels.  One grid step == one sample.
# ----------------------------------------------------------------------------
def _fused_kernel(wf_ref, params_ref, patches_ref, out_ref,
                  *, groups, eps, p_valid):
    wf = wf_ref[...]                       # (C, K)     flattened conv weight
    patch = patches_ref[0]                 # (K, Ppad)  im2col patches, this sample
    params = params_ref[...]               # (C, 3)     [bias | gamma | beta]
    bias = params[:, 0:1]                  # (C, 1)
    gamma = params[:, 1:2]
    beta = params[:, 2:3]

    # Convolution hot path: MXU matmul + bias.
    # (f32 operands kept for exactness; bf16 cast would be the lever if this
    # ever became MXU-bound at realistic shapes.)
    xc = jnp.dot(wf, patch, preferred_element_type=jnp.float32) + bias   # (C, Ppad)

    C, Ppad = xc.shape
    cpg = C // groups
    pad = Ppad - p_valid
    inv_gs = 1.0 / float(cpg * p_valid)

    # ---- GroupNorm statistics -----------------------------------------------
    # Single pass over (C, Ppad): per-channel sums.  Padded columns of `patch`
    # are exactly zero, so xc there equals bias -> remove that contribution
    # analytically instead of masking the full array.
    xsq = xc * xc                                           # hoisted, computed once
    row_sum = jnp.sum(xc, axis=1, keepdims=True) - bias * pad          # (C, 1)
    row_sq = jnp.sum(xsq, axis=1, keepdims=True) - bias * bias * pad   # (C, 1)

    # Combine cpg channels per group; all work below is on tiny (C,1) arrays.
    cid = lax.broadcasted_iota(jnp.int32, (C, 1), 0)
    mean_c = jnp.zeros((C, 1), jnp.float32)
    inv_c = jnp.zeros((C, 1), jnp.float32)
    for g in range(groups):                                  # static small loop
        gmask = (cid >= g * cpg) & (cid < (g + 1) * cpg)
        s = jnp.sum(jnp.where(gmask, row_sum, 0.0))
        ss = jnp.sum(jnp.where(gmask, row_sq, 0.0))
        mean = s * inv_gs
        var = ss * inv_gs - mean * mean
        inv_std = lax.rsqrt(var + eps)
        mean_c = jnp.where(gmask, mean, mean_c)
        inv_c = jnp.where(gmask, inv_std, inv_c)

    # ---- Fused affine + activations + residual (single (C,P) pass) ----------
    scale = inv_c * gamma                  # (C, 1)
    shift = beta - mean_c * scale          # (C, 1)
    y = xc * scale + shift
    z = jnp.tanh(y)
    hsw = z * (z + 3.0) * (1.0 / 6.0)      # "simplified hardswish" from CUDA code
    fused = xc + hsw                       # residual with conv output

    # ---- LogSumExp over the channel axis ------------------------------------
    # (padded lanes produce harmless finite junk; sliced off outside.)
    m = jnp.max(fused, axis=0, keepdims=True)                       # (1, Ppad)
    lse = jnp.log(jnp.sum(jnp.exp(fused - m), axis=0, keepdims=True)) + m

    out_ref[0] = lse                       # out block (1, 1, Ppad) — lane dense


def fused_conv_gn_act_lse(x, weight, bias, gamma, beta, *, groups, eps=1e-5):
    """x: (N, Cin, H, W) f32; weight: (Cout, Cin, k, k); bias/gamma/beta: (Cout,)."""
    N, Cin, H, W = x.shape
    Cout, _, kh, kw = weight.shape
    Ho, Wo = H - kh + 1, W - kw + 1
    P = Ho * Wo
    K = Cin * kh * kw
    LANE = 128
    Ppad = ((P + LANE - 1) // LANE) * LANE

    # ---- im2col (glue, plain JAX) ------------------------------------------
    # TODO(synk): for large H*W, build the k*k shifted views in-kernel from raw
    # x (memory_space=pl.ANY) to avoid the k*k HBM read amplification.
    cols = []
    for di in range(kh):
        for dj in range(kw):
            cols.append(x[:, :, di:di + Ho, dj:dj + Wo])      # (N, Cin, Ho, Wo)
    patches = jnp.stack(cols, axis=2)                         # (N, Cin, k*k, Ho, Wo)
    patches = patches.reshape(N, K, P).astype(jnp.float32)    # idx = c*k*k + di*k + dj
    patches = jnp.pad(patches, ((0, 0), (0, 0), (0, Ppad - P)))   # lane-pad to 128x

    wf = weight.reshape(Cout, K).astype(jnp.float32)          # matches patch ordering
    params = jnp.stack([bias.astype(jnp.float32),
                        gamma.astype(jnp.float32),
                        beta.astype(jnp.float32)], axis=1)    # (Cout, 3)

    kernel = functools.partial(_fused_kernel, groups=groups, eps=eps, p_valid=P)

    out_flat = pl.pallas_call(
        kernel,
        out_shape=jax.ShapeDtypeStruct((N, 1, Ppad), jnp.float32),
        grid_spec=pltpu.PrefetchScalarGridSpec(
            num_scalar_prefetch=0,
            grid=(N,),
            in_specs=[
                pl.BlockSpec((Cout, K), lambda n: (0, 0)),        # conv weight (flat)
                pl.BlockSpec((Cout, 3), lambda n: (0, 0)),        # packed bias/gamma/beta
                pl.BlockSpec((1, K, Ppad), lambda n: (n, 0, 0)),  # im2col patches
            ],
            out_specs=pl.BlockSpec((1, 1, Ppad), lambda n: (n, 0, 0)),
        ),
        compiler_params=pltpu.CompilerParams(
            dimension_semantics=("parallel",)),   # maps samples to both TCs on v7x
    )(wf, params, patches)

    return out_flat[:, :, :P].reshape(N, 1, Ho, Wo)


# ----------------------------------------------------------------------------
# Pure-JAX reference (for correctness check only).
# ----------------------------------------------------------------------------
def _reference(x, weight, bias, gamma, beta, *, groups, eps=1e-5):
    xc = lax.conv_general_dilated(
        x, weight, window_strides=(1, 1), padding="VALID",
        dimension_numbers=("NCHW", "OIHW", "NCHW"))
    xc = xc + bias.reshape(1, -1, 1, 1)
    N, C, H, W = xc.shape
    cpg = C // groups
    xg = xc.reshape(N, groups, cpg, H, W)
    mean = jnp.mean(xg, axis=(2, 3, 4), keepdims=True)
    var = jnp.mean(xg * xg, axis=(2, 3, 4), keepdims=True) - mean * mean
    y = (xg - mean) * lax.rsqrt(var + eps)
    y = y.reshape(N, C, H, W) * gamma.reshape(1, -1, 1, 1) + beta.reshape(1, -1, 1, 1)
    z = jnp.tanh(y)
    hsw = z * (z + 3.0) / 6.0
    fused = xc + hsw
    m = jnp.max(fused, axis=1, keepdims=True)
    return jnp.log(jnp.sum(jnp.exp(fused - m), axis=1, keepdims=True)) + m


if __name__ == "__main__":
    # Small shapes consistent with the module.
    N, Cin, H, W = 2, 4, 16, 16
    Cout, k, groups, eps = 16, 3, 4, 1e-5

    key = jax.random.PRNGKey(0)
    kx, kw, kb, kg, kbe = jax.random.split(key, 5)

    x = jax.random.normal(kx, (N, Cin, H, W), dtype=jnp.float32)
    # Deterministic parameter init (PyTorch-like small uniform for conv).
    fan_in = Cin * k * k
    bound = 1.0 / (fan_in ** 0.5)
    weight = jax.random.uniform(kw, (Cout, Cin, k, k), jnp.float32, -bound, bound)
    bias = jax.random.uniform(kb, (Cout,), jnp.float32, -bound, bound)
    # GroupNorm affine params (perturbed from defaults to exercise the path).
    gamma = 1.0 + 0.1 * jax.random.normal(kg, (Cout,), dtype=jnp.float32)
    beta = 0.1 * jax.random.normal(kbe, (Cout,), dtype=jnp.float32)

    out = fused_conv_gn_act_lse(x, weight, bias, gamma, beta, groups=groups, eps=eps)
    out = jax.block_until_ready(out)

    ref = _reference(x, weight, bias, gamma, beta, groups=groups, eps=eps)
    assert out.shape == (N, 1, H - k + 1, W - k + 1), out.shape
    assert jnp.allclose(out, ref, atol=1e-4, rtol=1e-4), float(jnp.max(jnp.abs(out - ref)))

    print("KERNEL_OK")
</pallas_src>

<mosaic_0001>
module attributes {stable_mosaic.version = 11 : i64} {
  func.func @_fused_kernel(%arg0: i32, %arg1: memref<16x36xf32, #tpu.memory_space<vmem>>, %arg2: memref<16x3xf32, #tpu.memory_space<vmem>>, %arg3: memref<1x36x256xf32, #tpu.memory_space<vmem>>, %arg4: memref<1x1x256xf32, #tpu.memory_space<vmem>>) attributes {dimension_semantics = [#tpu.dimension_semantics<parallel>], iteration_bounds = array<i64: 2>, scalar_prefetch = 0 : i64, scratch_operands = 0 : i64, tpu.core_type = #tpu.core_type<tc>, window_params = [{pipeline_mode = #tpu.pipeline_mode<synchronous>, transform_indices = @transform_0, window_bounds = array<i64: 16, 36>}, {pipeline_mode = #tpu.pipeline_mode<synchronous>, transform_indices = @transform_1, window_bounds = array<i64: 16, 3>}, {transform_indices = @transform_2, window_bounds = array<i64: 1, 36, 256>}, {transform_indices = @transform_3, window_bounds = array<i64: 1, 1, 256>}]} {
    %c0 = arith.constant 0 : index
    %c0_0 = arith.constant 0 : index
    %0 = vector.load %arg1[%c0, %c0_0] : memref<16x36xf32, #tpu.memory_space<vmem>>, vector<16x36xf32>
    %c0_1 = arith.constant 0 : index
    %c0_2 = arith.constant 0 : index
    %c0_3 = arith.constant 0 : index
    %1 = vector.load %arg3[%c0_1, %c0_2, %c0_3] : memref<1x36x256xf32, #tpu.memory_space<vmem>>, vector<1x36x256xf32>
    %2 = vector.shape_cast %1 : vector<1x36x256xf32> to vector<36x256xf32>
    %c0_4 = arith.constant 0 : index
    %c0_5 = arith.constant 0 : index
    %3 = vector.load %arg2[%c0_4, %c0_5] : memref<16x3xf32, #tpu.memory_space<vmem>>, vector<16x3xf32>
    %4 = vector.extract_strided_slice %3 {offsets = [0, 0], sizes = [16, 1], strides = [1, 1]} : vector<16x3xf32> to vector<16x1xf32>
    %5 = vector.extract_strided_slice %3 {offsets = [0, 1], sizes = [16, 1], strides = [1, 1]} : vector<16x3xf32> to vector<16x1xf32>
    %6 = vector.extract_strided_slice %3 {offsets = [0, 2], sizes = [16, 1], strides = [1, 1]} : vector<16x3xf32> to vector<16x1xf32>
    %cst = arith.constant dense<0.000000e+00> : vector<16x256xf32>
    %7 = tpu.matmul %0, %2, %cst {dimension_numbers = #tpu.dot_dimension_numbers<[1], [0], [0], [1], [0, 0, 1, 1], [], []>} : vector<16x36xf32>, vector<36x256xf32>, vector<16x256xf32> -> vector<16x256xf32>
    %8 = vector.broadcast %4 : vector<16x1xf32> to vector<16x256xf32>
    %9 = arith.addf %7, %8 : vector<16x256xf32>
    %10 = arith.mulf %9, %9 : vector<16x256xf32>
    %cst_6 = arith.constant dense<0.000000e+00> : vector<16xf32>
    %11 = vector.multi_reduction <add>, %9, %cst_6 [1] : vector<16x256xf32> to vector<16xf32>
    %12 = vector.shape_cast %11 : vector<16xf32> to vector<16x1xf32>
    %cst_7 = arith.constant 6.000000e+01 : f32
    %13 = vector.broadcast %cst_7 : f32 to vector<16x1xf32>
    %14 = arith.mulf %4, %13 : vector<16x1xf32>
    %15 = arith.subf %12, %14 : vector<16x1xf32>
    %cst_8 = arith.constant dense<0.000000e+00> : vector<16xf32>
    %16 = vector.multi_reduction <add>, %10, %cst_8 [1] : vector<16x256xf32> to vector<16xf32>
    %17 = vector.shape_cast %16 : vector<16xf32> to vector<16x1xf32>
    %18 = arith.mulf %4, %4 : vector<16x1xf32>
    %cst_9 = arith.constant 6.000000e+01 : f32
    %19 = vector.broadcast %cst_9 : f32 to vector<16x1xf32>
    %20 = arith.mulf %18, %19 : vector<16x1xf32>
    %21 = arith.subf %17, %20 : vector<16x1xf32>
    %22 = tpu.iota {dimensions = array<i32: 0>} : vector<16x1xi32>
    %cst_10 = arith.constant 0.000000e+00 : f32
    %23 = vector.broadcast %cst_10 : f32 to vector<16x1xf32>
    %cst_11 = arith.constant 0.000000e+00 : f32
    %24 = vector.broadcast %cst_11 : f32 to vector<16x1xf32>
    %c0_i32 = arith.constant 0 : i32
    %25 = vector.broadcast %c0_i32 : i32 to vector<16x1xi32>
    %26 = arith.cmpi sge, %22, %25 : vector<16x1xi32>
    %c4_i32 = arith.constant 4 : i32
    %27 = vector.broadcast %c4_i32 : i32 to vector<16x1xi32>
    %28 = arith.cmpi slt, %22, %27 : vector<16x1xi32>
    %29 = arith.andi %26, %28 : vector<16x1xi1>
    %cst_12 = arith.constant 0.000000e+00 : f32
    %30 = vector.broadcast %cst_12 : f32 to vector<16x1xf32>
    %31 = arith.select %29, %15, %30 : vector<16x1xi1>, vector<16x1xf32>
    %32 = vector.shape_cast %31 : vector<16x1xf32> to vector<1x16x1xf32>
    %cst_13 = arith.constant dense<0.000000e+00> : vector<1xf32>
    %33 = vector.multi_reduction <add>, %32, %cst_13 [1, 2] : vector<1x16x1xf32> to vector<1xf32>
    %34 = vector.shape_cast %33 : vector<1xf32> to vector<1x1x1xf32>
    %35 = vector.extract %34[0, 0, 0] : f32 from vector<1x1x1xf32>
    %cst_14 = arith.constant 0.000000e+00 : f32
    %36 = vector.broadcast %cst_14 : f32 to vector<16x1xf32>
    %37 = arith.select %29, %21, %36 : vector<16x1xi1>, vector<16x1xf32>
    %38 = vector.shape_cast %37 : vector<16x1xf32> to vector<1x16x1xf32>
    %cst_15 = arith.constant dense<0.000000e+00> : vector<1xf32>
    %39 = vector.multi_reduction <add>, %38, %cst_15 [1, 2] : vector<1x16x1xf32> to vector<1xf32>
    %40 = vector.shape_cast %39 : vector<1xf32> to vector<1x1x1xf32>
    %41 = vector.extract %40[0, 0, 0] : f32 from vector<1x1x1xf32>
    %cst_16 = arith.constant 0.00127551018 : f32
    %42 = arith.mulf %35, %cst_16 : f32
    %cst_17 = arith.constant 0.00127551018 : f32
    %43 = arith.mulf %41, %cst_17 : f32
    %44 = arith.mulf %42, %42 : f32
    %45 = arith.subf %43, %44 : f32
    %cst_18 = arith.constant 9.99999974E-6 : f32
    %46 = arith.addf %45, %cst_18 : f32
    %47 = math.rsqrt %46 : f32
    %48 = vector.broadcast %42 : f32 to vector<16x1xf32>
    %49 = arith.select %29, %48, %23 : vector<16x1xi1>, vector<16x1xf32>
    %50 = vector.broadcast %47 : f32 to vector<16x1xf32>
    %51 = arith.select %29, %50, %24 : vector<16x1xi1>, vector<16x1xf32>
    %c4_i32_19 = arith.constant 4 : i32
    %52 = vector.broadcast %c4_i32_19 : i32 to vector<16x1xi32>
    %53 = arith.cmpi sge, %22, %52 : vector<16x1xi32>
    %c8_i32 = arith.constant 8 : i32
    %54 = vector.broadcast %c8_i32 : i32 to vector<16x1xi32>
    %55 = arith.cmpi slt, %22, %54 : vector<16x1xi32>
    %56 = arith.andi %53, %55 : vector<16x1xi1>
    %cst_20 = arith.constant 0.000000e+00 : f32
    %57 = vector.broadcast %cst_20 : f32 to vector<16x1xf32>
    %58 = arith.select %56, %15, %57 : vector<16x1xi1>, vector<16x1xf32>
    %59 = vector.shape_cast %58 : vector<16x1xf32> to vector<1x16x1xf32>
    %cst_21 = arith.constant dense<0.000000e+00> : vector<1xf32>
    %60 = vector.multi_reduction <add>, %59, %cst_21 [1, 2] : vector<1x16x1xf32> to vector<1xf32>
    %61 = vector.shape_cast %60 : vector<1xf32> to vector<1x1x1xf32>
    %62 = vector.extract %61[0, 0, 0] : f32 from vector<1x1x1xf32>
    %cst_22 = arith.constant 0.000000e+00 : f32
    %63 = vector.broadcast %cst_22 : f32 to vector<16x1xf32>
    %64 = arith.select %56, %21, %63 : vector<16x1xi1>, vector<16x1xf32>
    %65 = vector.shape_cast %64 : vector<16x1xf32> to vector<1x16x1xf32>
    %cst_23 = arith.constant dense<0.000000e+00> : vector<1xf32>
    %66 = vector.multi_reduction <add>, %65, %cst_23 [1, 2] : vector<1x16x1xf32> to vector<1xf32>
    %67 = vector.shape_cast %66 : vector<1xf32> to vector<1x1x1xf32>
    %68 = vector.extract %67[0, 0, 0] : f32 from vector<1x1x1xf32>
    %cst_24 = arith.constant 0.00127551018 : f32
    %69 = arith.mulf %62, %cst_24 : f32
    %cst_25 = arith.constant 0.00127551018 : f32
    %70 = arith.mulf %68, %cst_25 : f32
    %71 = arith.mulf %69, %69 : f32
    %72 = arith.subf %70, %71 : f32
    %cst_26 = arith.constant 9.99999974E-6 : f32
    %73 = arith.addf %72, %cst_26 : f32
    %74 = math.rsqrt %73 : f32
    %75 = vector.broadcast %69 : f32 to vector<16x1xf32>
    %76 = arith.select %56, %75, %49 : vector<16x1xi1>, vector<16x1xf32>
    %77 = vector.broadcast %74 : f32 to vector<16x1xf32>
    %78 = arith.select %56, %77, %51 : vector<16x1xi1>, vector<16x1xf32>
    %c8_i32_27 = arith.constant 8 : i32
    %79 = vector.broadcast %c8_i32_27 : i32 to vector<16x1xi32>
    %80 = arith.cmpi sge, %22, %79 : vector<16x1xi32>
    %c12_i32 = arith.constant 12 : i32
    %81 = vector.broadcast %c12_i32 : i32 to vector<16x1xi32>
    %82 = arith.cmpi slt, %22, %81 : vector<16x1xi32>
    %83 = arith.andi %80, %82 : vector<16x1xi1>
    %cst_28 = arith.constant 0.000000e+00 : f32
    %84 = vector.broadcast %cst_28 : f32 to vector<16x1xf32>
    %85 = arith.select %83, %15, %84 : vector<16x1xi1>, vector<16x1xf32>
    %86 = vector.shape_cast %85 : vector<16x1xf32> to vector<1x16x1xf32>
    %cst_29 = arith.constant dense<0.000000e+00> : vector<1xf32>
    %87 = vector.multi_reduction <add>, %86, %cst_29 [1, 2] : vector<1x16x1xf32> to vector<1xf32>
    %88 = vector.shape_cast %87 : vector<1xf32> to vector<1x1x1xf32>
    %89 = vector.extract %88[0, 0, 0] : f32 from vector<1x1x1xf32>
    %cst_30 = arith.constant 0.000000e+00 : f32
    %90 = vector.broadcast %cst_30 : f32 to vector<16x1xf32>
    %91 = arith.select %83, %21, %90 : vector<16x1xi1>, vector<16x1xf32>
    %92 = vector.shape_cast %91 : vector<16x1xf32> to vector<1x16x1xf32>
    %cst_31 = arith.constant dense<0.000000e+00> : vector<1xf32>
    %93 = vector.multi_reduction <add>, %92, %cst_31 [1, 2] : vector<1x16x1xf32> to vector<1xf32>
    %94 = vector.shape_cast %93 : vector<1xf32> to vector<1x1x1xf32>
    %95 = vector.extract %94[0, 0, 0] : f32 from vector<1x1x1xf32>
    %cst_32 = arith.constant 0.00127551018 : f32
    %96 = arith.mulf %89, %cst_32 : f32
    %cst_33 = arith.constant 0.00127551018 : f32
    %97 = arith.mulf %95, %cst_33 : f32
    %98 = arith.mulf %96, %96 : f32
    %99 = arith.subf %97, %98 : f32
    %cst_34 = arith.constant 9.99999974E-6 : f32
    %100 = arith.addf %99, %cst_34 : f32
    %101 = math.rsqrt %100 : f32
    %102 = vector.broadcast %96 : f32 to vector<16x1xf32>
    %103 = arith.select %83, %102, %76 : vector<16x1xi1>, vector<16x1xf32>
    %104 = vector.broadcast %101 : f32 to vector<16x1xf32>
    %105 = arith.select %83, %104, %78 : vector<16x1xi1>, vector<16x1xf32>
    %c12_i32_35 = arith.constant 12 : i32
    %106 = vector.broadcast %c12_i32_35 : i32 to vector<16x1xi32>
    %107 = arith.cmpi sge, %22, %106 : vector<16x1xi32>
    %c16_i32 = arith.constant 16 : i32
    %108 = vector.broadcast %c16_i32 : i32 to vector<16x1xi32>
    %109 = arith.cmpi slt, %22, %108 : vector<16x1xi32>
    %110 = arith.andi %107, %109 : vector<16x1xi1>
    %cst_36 = arith.constant 0.000000e+00 : f32
    %111 = vector.broadcast %cst_36 : f32 to vector<16x1xf32>
    %112 = arith.select %110, %15, %111 : vector<16x1xi1>, vector<16x1xf32>
    %113 = vector.shape_cast %112 : vector<16x1xf32> to vector<1x16x1xf32>
    %cst_37 = arith.constant dense<0.000000e+00> : vector<1xf32>
    %114 = vector.multi_reduction <add>, %113, %cst_37 [1, 2] : vector<1x16x1xf32> to vector<1xf32>
    %115 = vector.shape_cast %114 : vector<1xf32> to vector<1x1x1xf32>
    %116 = vector.extract %115[0, 0, 0] : f32 from vector<1x1x1xf32>
    %cst_38 = arith.constant 0.000000e+00 : f32
    %117 = vector.broadcast %cst_38 : f32 to vector<16x1xf32>
    %118 = arith.select %110, %21, %117 : vector<16x1xi1>, vector<16x1xf32>
    %119 = vector.shape_cast %118 : vector<16x1xf32> to vector<1x16x1xf32>
    %cst_39 = arith.constant dense<0.000000e+00> : vector<1xf32>
    %120 = vector.multi_reduction <add>, %119, %cst_39 [1, 2] : vector<1x16x1xf32> to vector<1xf32>
    %121 = vector.shape_cast %120 : vector<1xf32> to vector<1x1x1xf32>
    %122 = vector.extract %121[0, 0, 0] : f32 from vector<1x1x1xf32>
    %cst_40 = arith.constant 0.00127551018 : f32
    %123 = arith.mulf %116, %cst_40 : f32
    %cst_41 = arith.constant 0.00127551018 : f32
    %124 = arith.mulf %122, %cst_41 : f32
    %125 = arith.mulf %123, %123 : f32
    %126 = arith.subf %124, %125 : f32
    %cst_42 = arith.constant 9.99999974E-6 : f32
    %127 = arith.addf %126, %cst_42 : f32
    %128 = math.rsqrt %127 : f32
    %129 = vector.broadcast %123 : f32 to vector<16x1xf32>
    %130 = arith.select %110, %129, %103 : vector<16x1xi1>, vector<16x1xf32>
    %131 = vector.broadcast %128 : f32 to vector<16x1xf32>
    %132 = arith.select %110, %131, %105 : vector<16x1xi1>, vector<16x1xf32>
    %133 = arith.mulf %132, %5 : vector<16x1xf32>
    %134 = arith.mulf %130, %133 : vector<16x1xf32>
    %135 = arith.subf %6, %134 : vector<16x1xf32>
    %136 = vector.broadcast %133 : vector<16x1xf32> to vector<16x256xf32>
    %137 = arith.mulf %9, %136 : vector<16x256xf32>
    %138 = vector.broadcast %135 : vector<16x1xf32> to vector<16x256xf32>
    %139 = arith.addf %137, %138 : vector<16x256xf32>
    %140 = math.tanh %139 : vector<16x256xf32>
    %cst_43 = arith.constant 3.000000e+00 : f32
    %141 = vector.broadcast %cst_43 : f32 to vector<16x256xf32>
    %142 = arith.addf %140, %141 : vector<16x256xf32>
    %143 = arith.mulf %140, %142 : vector<16x256xf32>
    %cst_44 = arith.constant 0.166666672 : f32
    %144 = vector.broadcast %cst_44 : f32 to vector<16x256xf32>
    %145 = arith.mulf %143, %144 : vector<16x256xf32>
    %146 = arith.addf %9, %145 : vector<16x256xf32>
    %cst_45 = arith.constant dense<0xFF800000> : vector<256xf32>
    %147 = vector.multi_reduction <maximumf>, %146, %cst_45 [0] : vector<16x256xf32> to vector<256xf32>
    %148 = vector.shape_cast %147 : vector<256xf32> to vector<1x256xf32>
    %149 = vector.broadcast %148 : vector<1x256xf32> to vector<16x256xf32>
    %150 = arith.subf %146, %149 : vector<16x256xf32>
    %151 = math.exp %150 : vector<16x256xf32>
    %cst_46 = arith.constant dense<0.000000e+00> : vector<256xf32>
    %152 = vector.multi_reduction <add>, %151, %cst_46 [0] : vector<16x256xf32> to vector<256xf32>
    %153 = vector.shape_cast %152 : vector<256xf32> to vector<1x256xf32>
    %154 = math.log %153 : vector<1x256xf32>
    %155 = arith.addf %154, %148 : vector<1x256xf32>
    %c0_47 = arith.constant 0 : index
    %c0_48 = arith.constant 0 : index
    %c0_49 = arith.constant 0 : index
    %156 = vector.load %arg4[%c0_47, %c0_48, %c0_49] : memref<1x1x256xf32, #tpu.memory_space<vmem>>, vector<1x1x256xf32>
    %157 = vector.shape_cast %156 : vector<1x1x256xf32> to vector<1x256xf32>
    %158 = vector.shape_cast %155 : vector<1x256xf32> to vector<1x1x256xf32>
    tpu.vector_store %arg4[%c0_47, %c0_48, %c0_49], %158 {strides = array<i32>} : memref<1x1x256xf32, #tpu.memory_space<vmem>>, vector<1x1x256xf32>,
    return
  }
  func.func @transform_0(%arg0: i32) -> (i32, i32) {
    %c0_i32 = arith.constant 0 : i32
    %c0_i32_0 = arith.constant 0 : i32
    %c0_i32_1 = arith.constant 0 : i32
    return %c0_i32, %c0_i32_0 : i32, i32
  }
  func.func @transform_1(%arg0: i32) -> (i32, i32) {
    %c0_i32 = arith.constant 0 : i32
    %c0_i32_0 = arith.constant 0 : i32
    %c0_i32_1 = arith.constant 0 : i32
    return %c0_i32, %c0_i32_0 : i32, i32
  }
  func.func @transform_2(%arg0: i32) -> (i32, i32, i32) {
    %c0_i32 = arith.constant 0 : i32
    %c0_i32_0 = arith.constant 0 : i32
    %c0_i32_1 = arith.constant 0 : i32
    return %arg0, %c0_i32, %c0_i32_0 : i32, i32, i32
  }
  func.func @transform_3(%arg0: i32) -> (i32, i32, i32) {
    %c0_i32 = arith.constant 0 : i32
    %c0_i32_0 = arith.constant 0 : i32
    %c0_i32_1 = arith.constant 0 : i32
    return %arg0, %c0_i32, %c0_i32_0 : i32, i32, i32
  }
}

</mosaic_0001>

<llo_original>
// kernel: tpu_custom_call.1
$region0: #{tpu_custom_call.1}
  #allocation0 [shape = 'u32[]', space=smem, size = 0x4, offset = 0x4, fixed_abs, tag = 'smem constant byte address 0x4 - core index']
  #allocation1 [shape = 'u32[72,128]{1,0:T(1,128)}', space=vmem, size = 0x9000, scoped, tag = 'internal scratch']
  %s0 = inlined_call_operand.vmem [shape: f32[16,36], index: 0, kind: input, shape index: {}]
  %s1 = inlined_call_operand.vmem [shape: f32[16,3], index: 1, kind: input, shape index: {}]
  %s2 = inlined_call_operand.vmem [shape: f32[2,36,256], index: 2, kind: input, shape index: {}]
  %s3 = inlined_call_operand.hbm [shape: f32[2,1,256], index: 3, kind: output, shape index: {}]
  %s4 = sld [smem:[#allocation0]]
  $region45: #{tpu_custom_call.1} parent=0
    _
  %s6 = ssub.s32 1, %s4
  %s7 = scalar_select 0, %s6, %s4
  $region1: #{tpu_custom_call.1} parent=0
    #allocation2 [shape = 'u8[2048]{0}', space=vmem, size = 0x800, scoped, tag = 'output window, operand 0']
    #allocation3 [shape = 's32[2]{0}', space=sflag, size = 0x8, scoped, tag = 'scoped memory for tpu_custom_call.1']
    %8 = vsyncpa [#allocation3], 0
    %s9 = scalar_lea.sflag [#allocation3], 1
    %10 = vsyncpa %s9, 0
    loop: start=0, step=1, limit=4
    $region2: #{tpu_custom_call.1} parent=1 // loop_pre_header
      _
    $region3: #{tpu_custom_call.1} parent=1 // loop_header
      %s12 = sphi 0, %s16
      %p13 = scmp.ge.s32.totalorder %s12, 4
      %s20 = sphi 0, %s20
      %s22 = sphi 0, %s20
      %s23 = sphi 0, %s22
      %s37 = sphi 0, %s23
      %s41 = sphi 0, %s41
      %s43 = sphi 0, %s41
      %s44 = sphi 0, %s43
      %s58 = sphi 0, %s44
      %s64 = sphi 0, %s66
      %s67 = sphi 0, %s64
      %s68 = sphi 0, %s67
      %s84 = sphi 0, %s68
      %s90 = sphi 0, %s92
      %s93 = sphi 0, %s90
      %s94 = sphi 0, %s93
      %s110 = sphi 0, %s94
    $region4: #{tpu_custom_call.1} parent=1 // loop_header_branch
      %15 = sbr.rel (%p13) target = $region8
    $region5: #{tpu_custom_call.1} parent=1 // loop_body
      %s17 = ssub.s32 %s12, 1
      %s18 = ssub.s32 %s12, 2
      %s19 = sadd.s32 %s12, 1
      %s21 = sadd.s32 %s20, 1
      %p24 = scmp.eq.s32.totalorder %s12, 1
      %p25 = scmp.ne.s32.totalorder %s20, %s22
      %p26 = scmp.eq.s32.totalorder %s12, 0
      %p27 = por %p25, %p26
      %p28 = scmp.ne.s32.totalorder %s20, %s22
      %p29 = scmp.eq.s32.totalorder %s17, 1
      %p30 = por %p28, %p29
      %p31 = scmp.ne.s32.totalorder %s22, %s23
      %p32 = scmp.eq.s32.totalorder %s17, 0
      %p33 = por %p31, %p32
      %p34 = scmp.ne.s32.totalorder %s22, %s23
      %p35 = scmp.eq.s32.totalorder %s18, 1
      %p36 = por %p34, %p35
      %p38 = scmp.ne.s32.totalorder %s23, %s37
      %p39 = scmp.eq.s32.totalorder %s18, 0
      %p40 = por %p38, %p39
      %s42 = sadd.s32 %s41, 1
      %p45 = scmp.eq.s32.totalorder %s12, 1
      %p46 = scmp.ne.s32.totalorder %s41, %s43
      %p47 = scmp.eq.s32.totalorder %s12, 0
      %p48 = por %p46, %p47
      %p49 = scmp.ne.s32.totalorder %s41, %s43
      %p50 = scmp.eq.s32.totalorder %s17, 1
      %p51 = por %p49, %p50
      %p52 = scmp.ne.s32.totalorder %s43, %s44
      %p53 = scmp.eq.s32.totalorder %s17, 0
      %p54 = por %p52, %p53
      %p55 = scmp.ne.s32.totalorder %s43, %s44
      %p56 = scmp.eq.s32.totalorder %s18, 1
      %p57 = por %p55, %p56
      %p59 = scmp.ne.s32.totalorder %s44, %s58
      %p60 = scmp.eq.s32.totalorder %s18, 0
      %p61 = por %p59, %p60
      %s62 = ssub.s32 %s12, %s19
      %p63 = scmp.eq.s32.totalorder %s62, 0
      %s65 = sadd.s32 %s64, 1
      %s66 = scalar_select %p63, %s64, %s65
      %p69 = pneg %p63
      %p70 = scmp.eq.s32.totalorder %s12, 1
      %p71 = por %p69, %p70
      %p72 = scmp.ne.s32.totalorder %s64, %s67
      %p73 = scmp.eq.s32.totalorder %s12, 0
      %p74 = por %p72, %p73
      %p75 = scmp.ne.s32.totalorder %s64, %s67
      %p76 = scmp.eq.s32.totalorder %s17, 1
      %p77 = por %p75, %p76
      %p78 = scmp.ne.s32.totalorder %s67, %s68
      %p79 = scmp.eq.s32.totalorder %s17, 0
      %p80 = por %p78, %p79
      %p81 = scmp.ne.s32.totalorder %s67, %s68
      %p82 = scmp.eq.s32.totalorder %s18, 1
      %p83 = por %p81, %p82
      %p85 = scmp.ne.s32.totalorder %s68, %s84
      %p86 = scmp.eq.s32.totalorder %s18, 0
      %p87 = por %p85, %p86
      %s88 = ssub.s32 %s12, %s19
      %p89 = scmp.eq.s32.totalorder %s88, 0
      %s91 = sadd.s32 %s90, 1
      %s92 = scalar_select %p89, %s90, %s91
      %p95 = pneg %p89
      %p96 = scmp.eq.s32.totalorder %s12, 1
      %p97 = por %p95, %p96
      %p98 = scmp.ne.s32.totalorder %s90, %s93
      %p99 = scmp.eq.s32.totalorder %s12, 0
      %p100 = por %p98, %p99
      %p101 = scmp.ne.s32.totalorder %s90, %s93
      %p102 = scmp.eq.s32.totalorder %s17, 1
      %p103 = por %p101, %p102
      %p104 = scmp.ne.s32.totalorder %s93, %s94
      %p105 = scmp.eq.s32.totalorder %s17, 0
      %p106 = por %p104, %p105
      %p107 = scmp.ne.s32.totalorder %s93, %s94
      %p108 = scmp.eq.s32.totalorder %s18, 1
      %p109 = por %p107, %p108
      %p111 = scmp.ne.s32.totalorder %s94, %s110
      %p112 = scmp.eq.s32.totalorder %s18, 0
      %p113 = por %p111, %p112
      %p114 = scmp.le.s32.totalorder 1, %s12
      %p115 = scmp.lt.s32.totalorder %s12, 3
      %p116 = pnand %p114, %p115
      %p117 = pneg %p116
      // Predicated region
      $region9: #{tpu_custom_call.1} parent=5 // pred_check
        _
      $region10: #{tpu_custom_call.1} parent=5 // pred_check_branch
        %119 = sbr.rel (%p116) target = $region12
      $region11: #{tpu_custom_call.1} parent=5 // pred_region
        %s120 = ssub.s32 %s12, 1
        // Predicated region
        $region13: #{tpu_custom_call.1} parent=11 // pred_check
          %p121 = pneg %p33
        $region14: #{tpu_custom_call.1} parent=11 // pred_check_branch
          %123 = sbr.rel (%p121) target = $region16
        $region15: #{tpu_custom_call.1} parent=11 // pred_region
          _
        $region16: #{tpu_custom_call.1} parent=11 // pred_fallthru
          _
        // Predicated region
        $region17: #{tpu_custom_call.1} parent=11 // pred_check
          %p124 = pneg %p54
        $region18: #{tpu_custom_call.1} parent=11 // pred_check_branch
          %126 = sbr.rel (%p124) target = $region20
        $region19: #{tpu_custom_call.1} parent=11 // pred_region
          _
        $region20: #{tpu_custom_call.1} parent=11 // pred_fallthru
          _
      $region12: #{tpu_custom_call.1} parent=5 // pred_fallthru
        _
      %p127 = scmp.lt.s32.totalorder %s12, 2
      // Predicated region
      $region21: #{tpu_custom_call.1} parent=5 // pred_check
        %p128 = pneg %p127
      $region22: #{tpu_custom_call.1} parent=5 // pred_check_branch
        %130 = sbr.rel (%p128) target = $region24
      $region23: #{tpu_custom_call.1} parent=5 // pred_region
        // Predicated region
        $region25: #{tpu_custom_call.1} parent=23 // pred_check
          %p131 = pneg %p74
        $region26: #{tpu_custom_call.1} parent=23 // pred_check_branch
          %133 = sbr.rel (%p131) target = $region28
        $region27: #{tpu_custom_call.1} parent=23 // pred_region
          %p134 = scmp.lt.s32.totalorder %s12, 1
          %s135 = scalar_select %p134, %s12, 1
          %s136 = smul.addr %s135, 10
          %s137 = smul.addr %s136, 8
          %s138 = scalar_lea.vmem %s2, %s137
        $region28: #{tpu_custom_call.1} parent=23 // pred_fallthru
          _
      $region24: #{tpu_custom_call.1} parent=5 // pred_fallthru
        _
      %p139 = scmp.le.s32.totalorder 1, %s12
      %p140 = scmp.lt.s32.totalorder %s12, 3
      %p141 = pnand %p139, %p140
      %p142 = pneg %p141
      // Predicated region
      $region29: #{tpu_custom_call.1} parent=5 // pred_check
        _
      $region30: #{tpu_custom_call.1} parent=5 // pred_check_branch
        %144 = sbr.rel (%p141) target = $region32
      $region31: #{tpu_custom_call.1} parent=5 // pred_region
        %s145 = ssub.s32 %s12, 1
        %p146 = pneg %p33
        %p147 = pneg %p30
        %p148 = pneg %p54
        %p149 = pneg %p51
        %p150 = scmp.lt.s32.totalorder %s17, 1
        %s151 = scalar_select %p150, %s17, 1
        %s152 = smul.addr %s151, 10
        %s153 = smul.addr %s152, 8
        %s154 = scalar_lea.vmem %s2, %s153
        %p155 = pneg %p80
        %p156 = pneg %p77
        %p157 = pneg %p106
        %p158 = pneg %p103
        %s159 = sand.u32 %s93, 1
        %s160 = scalar_lea.sflag [#allocation3], %s159
        %s161 = sand.u32 %s93, 1
        %s162 = smul.addr %s161, 2
        %s163 = scalar_lea.vmem [#allocation2], %s162
        %p164 = scmp.lt.s32.totalorder %s17, 1
        %s165 = scalar_select %p164, %s17, 1
        %s166 = smul.addr %s165, 10
        %s167 = smul.addr %s166, 8
        %s168 = scalar_lea.vmem %s2, %s167
        %v169 = vld [vmem:[%s0] sm:$0xff]
        %v170 = vld [vmem:[%s0 + $0x8] sm:$0xff]
        %v171 = vld [vmem:[%s168] sm:$0xff]
        %v172 = vld [vmem:[%s168 + $0x8] sm:$0xff]
        %v173 = vld [vmem:[%s168 + $0x10] sm:$0xff]
        %v174 = vld [vmem:[%s168 + $0x18] sm:$0xff]
        %v175 = vld [vmem:[%s168 + $0x20] sm:$0xff]
        %v176 = vld [vmem:[%s168 + $0x28] sm:$0xff]
        %v177 = vld [vmem:[%s168 + $0x30] sm:$0xff]
        %v178 = vld [vmem:[%s168 + $0x38] sm:$0xff]
        %v179 = vld [vmem:[%s168 + $0x40] sm:$0xf]
        %v180 = vld [vmem:[%s168 + $0x48] sm:$0xf]
        %v181 = vld [vmem:[%s1] sm:$0xff]
        %v182 = vld [vmem:[%s1 + $0x8] sm:$0xff]
        %184 = vset.pattern.permute.xlu0 0
        %185 = vperm.xlu0 %184, %v181
        %v186 = vpop.permute.xlu0 %185
        %189 = vset.pattern.permute.xlu0 0
        %190 = vperm.xlu0 %189, %v182
        %v191 = vpop.permute.xlu0 %190
        %vm193 = vcmask 293888
        %v195 = vsel %vm193, %v169, 0
        %v198 = vsel %vm193, %v170, 0
        %vm200 = vcmask 1043456
        %v202 = vsel %vm200, %v179, 0
        %v205 = vsel %vm200, %v180, 0
        %207 = vmatpush.msra.mxu0 0.0
        %208 = vmatpush.msra.mxu0 0.0
        %209 = vmatpush.msra.mxu0 0.0
        %210 = vmatpush.msra.mxu0 0.0
        %211 = vmatpush.msra.mxu0 0.0
        %212 = vmatpush.msra.mxu0 0.0
        %213 = vmatpush.msra.mxu0 0.0
        %214 = vmatpush.msra.mxu0 0.0
        %215 = vmatpush.msra.mxu0 0.0
        %216 = vmatpush.msra.mxu0 0.0
        %217 = vmatpush.msra.mxu0 0.0
        %218 = vmatpush.msra.mxu0 %v202
        %219 = vmatpush.msra.mxu0 %v177
        %220 = vmatpush.msra.mxu0 %v175
        %221 = vmatpush.msra.mxu0 %v173
        %222 = vmatpush.msra.mxu0 %v171
        %223 = vmatmul.f32.gmra.mxu0 %v195
        %v224 = vpop.f32.mrf.mxu0
        %v225 = vadd.f32 %v186, %v224
        %226 = vmatmul.f32.gmra.mxu0 %v198
        %v227 = vpop.f32.mrf.mxu0
        %v228 = vadd.f32 %v191, %v227
        %229 = vdwg.mxu0
        %230 = vmatpush.msra.mxu0 0.0
        %231 = vmatpush.msra.mxu0 0.0
        %232 = vmatpush.msra.mxu0 0.0
        %233 = vmatpush.msra.mxu0 0.0
        %234 = vmatpush.msra.mxu0 0.0
        %235 = vmatpush.msra.mxu0 0.0
        %236 = vmatpush.msra.mxu0 0.0
        %237 = vmatpush.msra.mxu0 0.0
        %238 = vmatpush.msra.mxu0 0.0
        %239 = vmatpush.msra.mxu0 0.0
        %240 = vmatpush.msra.mxu0 0.0
        %241 = vmatpush.msra.mxu0 %v205
        %242 = vmatpush.msra.mxu0 %v178
        %243 = vmatpush.msra.mxu0 %v176
        %244 = vmatpush.msra.mxu0 %v174
        %245 = vmatpush.msra.mxu0 %v172
        %246 = vmatmul.f32.gmra.mxu0 %v195
        %v247 = vpop.f32.mrf.mxu0
        %v248 = vadd.f32 %v186, %v247
        %249 = vmatmul.f32.gmra.mxu0 %v198
        %v250 = vpop.f32.mrf.mxu0
        %v251 = vadd.f32 %v191, %v250
        %252 = vdwg.mxu0
        %v253 = vmul.f32 %v225, %v225
        %v254 = vmul.f32 %v248, %v248
        %v255 = vmul.f32 %v228, %v228
        %v256 = vmul.f32 %v251, %v251
        %v257 = vadd.f32 %v225, %v248
        %258 = vadd.xlane.f32.xlu0 %v257
        %v259 = vpop.xlane.xlu0 %258
        %v260 = vadd.f32 %v228, %v251
        %261 = vadd.xlane.f32.xlu0 %v260
        %v262 = vpop.xlane.xlu0 %261
        %v263 = vmul.f32 %v181, 60.0
        %v264 = vmul.f32 %v182, 60.0
        %v265 = vsub.f32 %v259, %v263
        %v266 = vsub.f32 %v262, %v264
        %v267 = vadd.f32 %v253, %v254
        %268 = vadd.xlane.f32.xlu0 %v267
        %v269 = vpop.xlane.xlu0 %268
        %v270 = vadd.f32 %v255, %v256
        %271 = vadd.xlane.f32.xlu0 %v270
        %v272 = vpop.xlane.xlu0 %271
        %v273 = vmul.f32 %v181, %v181
        %v274 = vmul.f32 %v182, %v182
        %v275 = vmul.f32 %v273, 60.0
        %v276 = vmul.f32 %v274, 60.0
        %v277 = vsub.f32 %v269, %v275
        %v278 = vsub.f32 %v272, %v276
        %v279 = vlaneseq
        %v280 = vshrl.u32 %v279, 7
        %v281 = vadd.s32 %v280, 8
        %vm282 = vcmp.ge.s32.totalorder %v280, 0
        %vm283 = vcmp.ge.s32.totalorder %v281, 0
        %vm284 = vcmp.lt.s32.totalorder %v280, 4
        %vm285 = vcmp.lt.s32.totalorder %v281, 4
        %vm286 = vmand %vm282, %vm284
        %vm287 = vmand %vm283, %vm285
        %v288 = vsel %vm286, %v265, 0.0
        %v289 = vsel %vm287, %v266, 0.0
        %vm290 = vcmask 7168
        %v291 = vsel %vm290, %v288, 0.0
        %v292 = vsel %vm290, %v289, 0.0
        %v293 = vadd.f32 %v291, %v292
        %294 = vadd.xlane.f32.xlu0 %v293
        %v295 = vpop.xlane.xlu0 %294
        %v296 = vrot.slane %v295, 4
        %v297 = vadd.f32 %v295, %v296
        %v298 = vrot.slane %v297, 2
        %v299 = vadd.f32 %v297, %v298
        %v300 = vrot.slane %v299, 1
        %v301 = vadd.f32 %v299, %v300
        %s302 = vtos %v301
        %v303 = vsel %vm286, %v277, 0.0
        %v304 = vsel %vm287, %v278, 0.0
        %v305 = vsel %vm290, %v303, 0.0
        %v306 = vsel %vm290, %v304, 0.0
        %v307 = vadd.f32 %v305, %v306
        %308 = vadd.xlane.f32.xlu0 %v307
        %v309 = vpop.xlane.xlu0 %308
        %v310 = vrot.slane %v309, 4
        %v311 = vadd.f32 %v309, %v310
        %v312 = vrot.slane %v311, 2
        %v313 = vadd.f32 %v311, %v312
        %v314 = vrot.slane %v313, 1
        %v315 = vadd.f32 %v313, %v314
        %s316 = vtos %v315
        %s317 = smul.f32 %s302, 0.0012755102
        %s318 = smul.f32 %s316, 0.0012755102
        %s319 = smul.f32 %s317, %s317
        %s320 = ssub.f32 %s318, %s319
        %s321 = sadd.f32 %s320, 1e-05
        %v322 = vstv %s321
        %v323 = vrsqrt.pop %v322
        %v324 = vmul.f32 %v323, %v322
        %v325 = vmul.f32 %v324, %v323
        %v326 = vmul.f32 0.5, %v325
        %v327 = vsub.f32 1.5, %v326
        %v328 = vmul.f32 %v323, %v327
        %vm329 = vweird.f32 %v322
        %vm330 = vweird.f32 %v323
        %vm331 = vmor %vm329, %vm330
        %v332 = vsel %vm331, %v323, %v328
        %s333 = vtos %v332
        %v334 = vstv %s317
        %v335 = vsel %vm286, %v334, 0.0
        %v336 = vsel %vm287, %v334, 0.0
        %v337 = vstv %s333
        %v338 = vsel %vm286, %v337, 0.0
        %v339 = vsel %vm287, %v337, 0.0
        %vm340 = vcmp.ge.s32.totalorder %v280, 4
        %vm341 = vcmp.ge.s32.totalorder %v281, 4
        %vm342 = vcmp.lt.s32.totalorder %v280, 8
        %vm343 = vcmp.lt.s32.totalorder %v281, 8
        %vm344 = vmand %vm340, %vm342
        %vm345 = vmand %vm341, %vm343
        %v346 = vsel %vm344, %v265, 0.0
        %v347 = vsel %vm345, %v266, 0.0
        %v348 = vsel %vm290, %v346, 0.0
        %v349 = vsel %vm290, %v347, 0.0
        %v350 = vadd.f32 %v348, %v349
        %351 = vadd.xlane.f32.xlu0 %v350
        %v352 = vpop.xlane.xlu0 %351
        %v353 = vrot.slane %v352, 4
        %v354 = vadd.f32 %v352, %v353
        %v355 = vrot.slane %v354, 2
        %v356 = vadd.f32 %v354, %v355
        %v357 = vrot.slane %v356, 1
        %v358 = vadd.f32 %v356, %v357
        %s359 = vtos %v358
        %v360 = vsel %vm344, %v277, 0.0
        %v361 = vsel %vm345, %v278, 0.0
        %v362 = vsel %vm290, %v360, 0.0
        %v363 = vsel %vm290, %v361, 0.0
        %v364 = vadd.f32 %v362, %v363
        %365 = vadd.xlane.f32.xlu0 %v364
        %v366 = vpop.xlane.xlu0 %365
        %v367 = vrot.slane %v366, 4
        %v368 = vadd.f32 %v366, %v367
        %v369 = vrot.slane %v368, 2
        %v370 = vadd.f32 %v368, %v369
        %v371 = vrot.slane %v370, 1
        %v372 = vadd.f32 %v370, %v371
        %s373 = vtos %v372
        %s374 = smul.f32 %s359, 0.0012755102
        %s375 = smul.f32 %s373, 0.0012755102
        %s376 = smul.f32 %s374, %s374
        %s377 = ssub.f32 %s375, %s376
        %s378 = sadd.f32 %s377, 1e-05
        %v379 = vstv %s378
        %v380 = vrsqrt.pop %v379
        %v381 = vmul.f32 %v380, %v379
        %v382 = vmul.f32 %v381, %v380
        %v383 = vmul.f32 0.5, %v382
        %v384 = vsub.f32 1.5, %v383
        %v385 = vmul.f32 %v380, %v384
        %vm386 = vweird.f32 %v379
        %vm387 = vweird.f32 %v380
        %vm388 = vmor %vm386, %vm387
        %v389 = vsel %vm388, %v380, %v385
        %s390 = vtos %v389
        %v391 = vstv %s374
        %v392 = vsel %vm344, %v391, %v335
        %v393 = vsel %vm345, %v391, %v336
        %v394 = vstv %s390
        %v395 = vsel %vm344, %v394, %v338
        %v396 = vsel %vm345, %v394, %v339
        %vm397 = vcmp.ge.s32.totalorder %v280, 8
        %vm398 = vcmp.ge.s32.totalorder %v281, 8
        %vm399 = vcmp.lt.s32.totalorder %v280, 12
        %vm400 = vcmp.lt.s32.totalorder %v281, 12
        %vm401 = vmand %vm397, %vm399
        %vm402 = vmand %vm398, %vm400
        %v403 = vsel %vm401, %v265, 0.0
        %v404 = vsel %vm402, %v266, 0.0
        %v405 = vsel %vm290, %v403, 0.0
        %v406 = vsel %vm290, %v404, 0.0
        %v407 = vadd.f32 %v405, %v406
        %408 = vadd.xlane.f32.xlu0 %v407
        %v409 = vpop.xlane.xlu0 %408
        %v410 = vrot.slane %v409, 4
        %v411 = vadd.f32 %v409, %v410
        %v412 = vrot.slane %v411, 2
        %v413 = vadd.f32 %v411, %v412
        %v414 = vrot.slane %v413, 1
        %v415 = vadd.f32 %v413, %v414
        %s416 = vtos %v415
        %v417 = vsel %vm401, %v277, 0.0
        %v418 = vsel %vm402, %v278, 0.0
        %v419 = vsel %vm290, %v417, 0.0
        %v420 = vsel %vm290, %v418, 0.0
        %v421 = vadd.f32 %v419, %v420
        %422 = vadd.xlane.f32.xlu0 %v421
        %v423 = vpop.xlane.xlu0 %422
        %v424 = vrot.slane %v423, 4
        %v425 = vadd.f32 %v423, %v424
        %v426 = vrot.slane %v425, 2
        %v427 = vadd.f32 %v425, %v426
        %v428 = vrot.slane %v427, 1
        %v429 = vadd.f32 %v427, %v428
        %s430 = vtos %v429
        %s431 = smul.f32 %s416, 0.0012755102
        %s432 = smul.f32 %s430, 0.0012755102
        %s433 = smul.f32 %s431, %s431
        %s434 = ssub.f32 %s432, %s433
        %s435 = sadd.f32 %s434, 1e-05
        %v436 = vstv %s435
        %v437 = vrsqrt.pop %v436
        %v438 = vmul.f32 %v437, %v436
        %v439 = vmul.f32 %v438, %v437
        %v440 = vmul.f32 0.5, %v439
        %v441 = vsub.f32 1.5, %v440
        %v442 = vmul.f32 %v437, %v441
        %vm443 = vweird.f32 %v436
        %vm444 = vweird.f32 %v437
        %vm445 = vmor %vm443, %vm444
        %v446 = vsel %vm445, %v437, %v442
        %s447 = vtos %v446
        %v448 = vstv %s431
        %v449 = vsel %vm401, %v448, %v392
        %v450 = vsel %vm402, %v448, %v393
        %v451 = vstv %s447
        %v452 = vsel %vm401, %v451, %v395
        %v453 = vsel %vm402, %v451, %v396
        %vm454 = vcmp.ge.s32.totalorder %v280, 12
        %vm455 = vcmp.ge.s32.totalorder %v281, 12
        %vm456 = vcmp.lt.s32.totalorder %v280, 16
        %vm457 = vcmp.lt.s32.totalorder %v281, 16
        %vm458 = vmand %vm454, %vm456
        %vm459 = vmand %vm455, %vm457
        %v460 = vsel %vm458, %v265, 0.0
        %v461 = vsel %vm459, %v266, 0.0
        %v462 = vsel %vm290, %v460, 0.0
        %v463 = vsel %vm290, %v461, 0.0
        %v464 = vadd.f32 %v462, %v463
        %465 = vadd.xlane.f32.xlu0 %v464
        %v466 = vpop.xlane.xlu0 %465
        %v467 = vrot.slane %v466, 4
        %v468 = vadd.f32 %v466, %v467
        %v469 = vrot.slane %v468, 2
        %v470 = vadd.f32 %v468, %v469
        %v471 = vrot.slane %v470, 1
        %v472 = vadd.f32 %v470, %v471
        %s473 = vtos %v472
        %v474 = vsel %vm458, %v277, 0.0
        %v475 = vsel %vm459, %v278, 0.0
        %v476 = vsel %vm290, %v474, 0.0
        %v477 = vsel %vm290, %v475, 0.0
        %v478 = vadd.f32 %v476, %v477
        %479 = vadd.xlane.f32.xlu0 %v478
        %v480 = vpop.xlane.xlu0 %479
        %v481 = vrot.slane %v480, 4
        %v482 = vadd.f32 %v480, %v481
        %v483 = vrot.slane %v482, 2
        %v484 = vadd.f32 %v482, %v483
        %v485 = vrot.slane %v484, 1
        %v486 = vadd.f32 %v484, %v485
        %s487 = vtos %v486
        %s488 = smul.f32 %s473, 0.0012755102
        %s489 = smul.f32 %s487, 0.0012755102
        %s490 = smul.f32 %s488, %s488
        %s491 = ssub.f32 %s489, %s490
        %s492 = sadd.f32 %s491, 1e-05
        %v493 = vstv %s492
        %v494 = vrsqrt.pop %v493
        %v495 = vmul.f32 %v494, %v493
        %v496 = vmul.f32 %v495, %v494
        %v497 = vmul.f32 0.5, %v496
        %v498 = vsub.f32 1.5, %v497
        %v499 = vmul.f32 %v494, %v498
        %vm500 = vweird.f32 %v493
        %vm501 = vweird.f32 %v494
        %vm502 = vmor %vm500, %vm501
        %v503 = vsel %vm502, %v494, %v499
        %s504 = vtos %v503
        %v505 = vstv %s488
        %v506 = vsel %vm458, %v505, %v449
        %v507 = vsel %vm459, %v505, %v450
        %v508 = vstv %s504
        %v509 = vsel %vm458, %v508, %v452
        %v510 = vsel %vm459, %v508, %v453
        %v511 = vmul.f32 %v509, %v181
        %v512 = vmul.f32 %v510, %v182
        %v513 = vmul.f32 %v506, %v511
        %v514 = vmul.f32 %v507, %v512
        %517 = vrot.lane.b32.xlu0 %v513, 1
        %v518 = vpop.permute.xlu0 %517
        %519 = vrot.lane.b32.xlu0 %v514, 1
        %v520 = vpop.permute.xlu0 %519
        %v523 = vsub.f32 %v181, %v518
        %v524 = vsub.f32 %v182, %v520
        %526 = vset.pattern.permute.xlu0 1
        %527 = vperm.xlu0 %526, %v511
        %v528 = vpop.permute.xlu0 %527
        %531 = vset.pattern.permute.xlu0 1
        %532 = vperm.xlu0 %531, %v512
        %v533 = vpop.permute.xlu0 %532
        %v535 = vmul.f32 %v225, %v528
        %v536 = vmul.f32 %v248, %v528
        %v537 = vmul.f32 %v228, %v533
        %v538 = vmul.f32 %v251, %v533
        %540 = vset.pattern.permute.xlu0 2
        %541 = vperm.xlu0 %540, %v523
        %v542 = vpop.permute.xlu0 %541
        %545 = vset.pattern.permute.xlu0 2
        %546 = vperm.xlu0 %545, %v524
        %v547 = vpop.permute.xlu0 %546
        %v549 = vadd.f32 %v535, %v542
        %v550 = vadd.f32 %v536, %v542
        %v551 = vadd.f32 %v537, %v547
        %v552 = vadd.f32 %v538, %v547
        %v553 = vtanh.pop %v549
        %v554 = vtanh.pop %v550
        %v555 = vtanh.pop %v551
        %v556 = vtanh.pop %v552
        %v557 = vadd.f32 %v553, 3.0
        %v558 = vadd.f32 %v554, 3.0
        %v559 = vadd.f32 %v555, 3.0
        %v560 = vadd.f32 %v556, 3.0
        %v561 = vmul.f32 %v553, %v557
        %v562 = vmul.f32 %v554, %v558
        %v563 = vmul.f32 %v555, %v559
        %v564 = vmul.f32 %v556, %v560
        %v565 = vmul.f32 %v561, 0.16666667
        %v566 = vmul.f32 %v562, 0.16666667
        %v567 = vmul.f32 %v563, 0.16666667
        %v568 = vmul.f32 %v564, 0.16666667
        %v569 = vadd.f32 %v225, %v565
        %v570 = vadd.f32 %v248, %v566
        %v571 = vadd.f32 %v228, %v567
        %v572 = vadd.f32 %v251, %v568
        %v573 = vmax.f32 %v569, %v571
        %v574 = vrot.slane %v573, 4
        %v575 = vmax.f32 %v573, %v574
        %v576 = vrot.slane %v575, 2
        %v577 = vmax.f32 %v575, %v576
        %v578 = vrot.slane %v577, 1
        %v579 = vmax.f32 %v577, %v578
        %v580 = vmax.f32 %v570, %v572
        %v581 = vrot.slane %v580, 4
        %v582 = vmax.f32 %v580, %v581
        %v583 = vrot.slane %v582, 2
        %v584 = vmax.f32 %v582, %v583
        %v585 = vrot.slane %v584, 1
        %v586 = vmax.f32 %v584, %v585
        %v587 = vsub.f32 %v569, %v579
        %v588 = vsub.f32 %v570, %v586
        %v589 = vsub.f32 %v571, %v579
        %v590 = vsub.f32 %v572, %v586
        %v591 = vmul.f32 %v587, 1.442695
        %v592 = vpow.pop %v591
        %v593 = vmul.f32 %v588, 1.442695
        %v594 = vpow.pop %v593
        %v595 = vmul.f32 %v589, 1.442695
        %v596 = vpow.pop %v595
        %v597 = vmul.f32 %v590, 1.442695
        %v598 = vpow.pop %v597
        %v599 = vadd.f32 %v592, %v596
        %v600 = vrot.slane %v599, 4
        %v601 = vadd.f32 %v599, %v600
        %v602 = vrot.slane %v601, 2
        %v603 = vadd.f32 %v601, %v602
        %v604 = vrot.slane %v603, 1
        %v605 = vadd.f32 %v603, %v604
        %v606 = vadd.f32 %v594, %v598
        %v607 = vrot.slane %v606, 4
        %v608 = vadd.f32 %v606, %v607
        %v609 = vrot.slane %v608, 2
        %v610 = vadd.f32 %v608, %v609
        %v611 = vrot.slane %v610, 1
        %v612 = vadd.f32 %v610, %v611
        %v613 = vlog2.pop %v605
        %v614 = vmul.f32 %v613, 0.6931472
        %v615 = vlog2.pop %v612
        %v616 = vmul.f32 %v615, 0.6931472
        %v617 = vadd.f32 %v614, %v579
        %v618 = vadd.f32 %v616, %v586
        %v621 = vrot.slane %v618, 7
        %vm622 = vcmask 1040384
        %v623 = vsel %vm622, %v617, %v621
        %v625 = vlaneseq
        %vm626 = vcmp.ge.s32.totalorder %v625, 0
        %vm627 = vcmp.lt.s32.totalorder %v625, 256
        %vm628 = vmand %vm626, %vm627
        %629 = vst.msk [vmem:[%s163] sm:$0x3] %vm628, %v623
        %s630 = sand.u32 %s93, 1
        %s631 = scalar_lea.sflag [#allocation3], %s630
        %s632 = sand.u32 %s93, 1
        %s633 = smul.addr %s632, 2
        %s634 = scalar_lea.vmem [#allocation2], %s633
        // Predicated region
        $region33: #{tpu_custom_call.1} parent=31 // pred_check
          %p635 = pneg %p103
        $region34: #{tpu_custom_call.1} parent=31 // pred_check_branch
          %637 = sbr.rel (%p635) target = $region36
        $region35: #{tpu_custom_call.1} parent=31 // pred_region
          %639 = vsyncadd %s631, 0
          %s640 = smul.addr %s17, 2
          %s641 = scalar_lea.hbm %s3, %s640
          %s643 = sshll.u32 %s634, 4
          %s644 = int_to_ptr.vmem [resolvable:$true] %s643
          %s645 = sshll.u32 %s641, 4
          %s646 = int_to_ptr.hbm [resolvable:$true] %s645
          %648 = dma.vmem_to_hbm [thread:$0]  %s644, 32, %s646, %s631
        $region36: #{tpu_custom_call.1} parent=31 // pred_fallthru
          _
      $region32: #{tpu_custom_call.1} parent=5 // pred_fallthru
        _
      %p649 = scmp.le.s32.totalorder 2, %s12
      // Predicated region
      $region37: #{tpu_custom_call.1} parent=5 // pred_check
        %p650 = pneg %p649
      $region38: #{tpu_custom_call.1} parent=5 // pred_check_branch
        %652 = sbr.rel (%p650) target = $region40
      $region39: #{tpu_custom_call.1} parent=5 // pred_region
        %s653 = ssub.s32 %s12, 2
        // Predicated region
        $region41: #{tpu_custom_call.1} parent=39 // pred_check
          %p654 = pneg %p109
        $region42: #{tpu_custom_call.1} parent=39 // pred_check_branch
          %656 = sbr.rel (%p654) target = $region44
        $region43: #{tpu_custom_call.1} parent=39 // pred_region
          %s657 = sand.u32 %s94, 1
          %s658 = scalar_lea.sflag [#allocation3], %s657
          %s659 = sand.u32 %s94, 1
          %s660 = smul.addr %s659, 2
          %s661 = scalar_lea.vmem [#allocation2], %s660
          %663 = dma.done %s658, 32
        $region44: #{tpu_custom_call.1} parent=39 // pred_fallthru
          _
      $region40: #{tpu_custom_call.1} parent=5 // pred_fallthru
        _
    $region6: #{tpu_custom_call.1} parent=1 // loop_footer
      %s16 = sadd.s32 1, %s12
    $region7: #{tpu_custom_call.1} parent=1 // loop_footer_branch
      %11 = sbr.rel target = $region3
    $region8: #{tpu_custom_call.1} parent=1 // loop_exit
      _
    %664 = vsyncpa [#allocation3], 1
    %s665 = scalar_lea.sflag [#allocation3], 1
    %666 = vsyncpa %s665, 1

</llo_original>
